<compile_context>
chip_gen: v6e
topology: v6e:2x2x1
jax: 0.10.0
libtpu: 0.0.40
codegen_flags: <defaults>
</compile_context>

<pallas_src>
import math
import numpy as np
import jax
import jax.numpy as jnp
from jax import lax
from jax.experimental import pallas as pl
from jax.experimental.pallas import tpu as pltpu


# ---------------------------------------------------------------------------
# Host-side helpers (mirror the PyTorch reference exactly).
# ---------------------------------------------------------------------------
def _np_sigmoid(v):
    return 1.0 / (1.0 + np.exp(-v))


def _jaccard_np(box_a, box_b):
    a_x1 = box_a[:, 0] - box_a[:, 2] / 2.0
    a_x2 = box_a[:, 0] + box_a[:, 2] / 2.0
    a_y1 = box_a[:, 1] - box_a[:, 3] / 2.0
    a_y2 = box_a[:, 1] + box_a[:, 3] / 2.0
    b_x1 = box_b[:, 0] - box_b[:, 2] / 2.0
    b_x2 = box_b[:, 0] + box_b[:, 2] / 2.0
    b_y1 = box_b[:, 1] - box_b[:, 3] / 2.0
    b_y2 = box_b[:, 1] + box_b[:, 3] / 2.0
    iw = np.clip(np.minimum(a_x2[:, None], b_x2[None, :]) -
                 np.maximum(a_x1[:, None], b_x1[None, :]), 0.0, None)
    ih = np.clip(np.minimum(a_y2[:, None], b_y2[None, :]) -
                 np.maximum(a_y1[:, None], b_y1[None, :]), 0.0, None)
    inter = iw * ih
    area_a = ((a_x2 - a_x1) * (a_y2 - a_y1))[:, None]
    area_b = ((b_x2 - b_x1) * (b_y2 - b_y1))[None, :]
    union = area_a + area_b - inter
    return inter / union


def get_target_np(targets, scaled_anchors, in_w, in_h, feature_length, num_anchors):
    # TODO(synk): scalar, data-dependent scatter over a handful of GT boxes;
    # kept on the host (numpy) rather than faking it in the kernel.
    bs = len(targets)
    idx = feature_length.index(in_w)
    anchor_index = [[0, 1, 2], [3, 4, 5], [6, 7, 8]][idx]
    subtract_index = [0, 3, 6][idx]
    na = num_anchors // 3
    shape = (bs, na, in_h, in_w)
    mask = np.zeros(shape, np.float32)
    noobj = np.ones(shape, np.float32)
    tx = np.zeros(shape, np.float32)
    ty = np.zeros(shape, np.float32)
    tw = np.zeros(shape, np.float32)
    th = np.zeros(shape, np.float32)
    tconf = np.zeros(shape, np.float32)
    yaw = np.zeros(shape, np.float32)
    pitch = np.zeros(shape, np.float32)
    roll = np.zeros(shape, np.float32)
    blsx = np.zeros(shape, np.float32)
    blsy = np.zeros(shape, np.float32)
    anchors = np.asarray(scaled_anchors, np.float32)
    for b in range(bs):
        t = np.asarray(targets[b], np.float32)
        if t.size == 0:
            continue
        gxs = t[:, 0] * in_w
        gys = t[:, 1] * in_h
        gws = t[:, 2] * in_w
        ghs = t[:, 3] * in_h
        gis = np.floor(gxs).astype(np.int64)
        gjs = np.floor(gys).astype(np.int64)
        gt_box = np.stack([np.zeros_like(gws), np.zeros_like(ghs), gws, ghs], axis=1)
        anchor_shapes = np.concatenate(
            [np.zeros((num_anchors, 2), np.float32), anchors], axis=1)
        anch_ious = _jaccard_np(gt_box, anchor_shapes)
        best_ns = np.argmax(anch_ious, axis=-1)
        for i, best_n in enumerate(best_ns):
            if int(best_n) not in anchor_index:
                continue
            gi, gj = int(gis[i]), int(gjs[i])
            if gj < in_h and gi < in_w:
                bn = int(best_n) - subtract_index
                noobj[b, bn, gj, gi] = 0.0
                mask[b, bn, gj, gi] = 1.0
                tx[b, bn, gj, gi] = gxs[i] - gi
                ty[b, bn, gj, gi] = gys[i] - gj
                tw[b, bn, gj, gi] = math.log(gws[i] / anchors[int(best_n)][0])
                th[b, bn, gj, gi] = math.log(ghs[i] / anchors[int(best_n)][1])
                blsx[b, bn, gj, gi] = t[i, 2]
                blsy[b, bn, gj, gi] = t[i, 3]
                tconf[b, bn, gj, gi] = 1.0
                yaw[b, bn, gj, gi] = t[i, 4]
                pitch[b, bn, gj, gi] = t[i, 5]
                roll[b, bn, gj, gi] = t[i, 6]
    return mask, noobj, tx, ty, tw, th, tconf, yaw, pitch, roll, blsx, blsy


# ---------------------------------------------------------------------------
# Pallas kernel.
# ---------------------------------------------------------------------------
def _make_kernel(Rt, sa, thr):
    aw0, aw1, aw2 = float(sa[0, 0]), float(sa[1, 0]), float(sa[2, 0])
    ah0, ah1, ah2 = float(sa[0, 1]), float(sa[1, 1]), float(sa[2, 1])
    zmax = 16.118095  # logit(1 - 1e-7): matches the eps-clipped reference BCE

    def kernel(cnt_ref, gt_ref, pred_ref, tmap_ref, grid_ref, out_ref):
        b = pl.program_id(1)
        a = pl.program_id(2)

        # per-anchor scaled anchors: 2 scalar selects on the grid index
        anc_w = jnp.where(a == 0, aw0, jnp.where(a == 1, aw1, aw2))
        anc_h = jnp.where(a == 0, ah0, jnp.where(a == 1, ah1, ah2))

        xr = pred_ref[0, 0, 0]
        yr = pred_ref[0, 0, 1]
        w = pred_ref[0, 0, 2]
        h = pred_ref[0, 0, 3]

        # sigmoid via a single EUP tanh (exact; no approx-reciprocal error)
        xs = 0.5 * jnp.tanh(0.5 * xr) + 0.5
        ys = 0.5 * jnp.tanh(0.5 * yr) + 0.5

        # decode boxes; grid_x/grid_y come from the resident constant input.
        # exp args clamped only here so extreme logits keep the IoU finite.
        gx = grid_ref[0]
        gy = grid_ref[1]
        pbw = jnp.exp(jnp.clip(w, -30.0, 30.0)) * anc_w
        pbh = jnp.exp(jnp.clip(h, -30.0, 30.0)) * anc_h
        pbx = xs + gx
        pby = ys + gy
        p_x1 = pbx - 0.5 * pbw
        p_x2 = pbx + 0.5 * pbw
        p_y1 = pby - 0.5 * pbh
        p_y2 = pby + 0.5 * pbh
        p_area = pbw * pbh

        # x/y/w/h losses first so xs/ys/w/h and their targets die before the
        # IoU loop (keeps the loop-spanning live set small).
        mask_t = tmap_ref[0, 0, 0]
        wm = tmap_ref[0, 0, 1]          # (2 - blsx*blsy) * mask, pre-combined
        lx = jnp.sum((xs - tmap_ref[0, 0, 2]) ** 2 * wm, axis=0, keepdims=True)
        ly = jnp.sum((ys - tmap_ref[0, 0, 3]) ** 2 * wm, axis=0, keepdims=True)
        lw = jnp.sum((w - tmap_ref[0, 0, 4]) ** 2 * (0.5 * wm),
                     axis=0, keepdims=True)
        lh = jnp.sum((h - tmap_ref[0, 0, 5]) ** 2 * (0.5 * wm),
                     axis=0, keepdims=True)

        # ignore mask: IoU against this batch's GT boxes (SMEM scalars) with a
        # dynamic trip count -> padded boxes cost nothing.
        cnt = cnt_ref[b]

        def iou_body(t, acc):
            o = t * 8
            g_x1 = gt_ref[b, o + 0]
            g_x2 = gt_ref[b, o + 1]
            g_y1 = gt_ref[b, o + 2]
            g_y2 = gt_ref[b, o + 3]
            g_area = gt_ref[b, o + 4]
            iw = jnp.maximum(jnp.minimum(p_x2, g_x2) - jnp.maximum(p_x1, g_x1), 0.0)
            ih = jnp.maximum(jnp.minimum(p_y2, g_y2) - jnp.maximum(p_y1, g_y1), 0.0)
            inter = iw * ih
            # exact divide: feeds a hard ">" threshold compare (parity w/ ref)
            iou = inter / (g_area + p_area - inter)
            return jnp.maximum(acc, iou)

        iou_max = lax.fori_loop(0, cnt, iou_body,
                                jnp.zeros((Rt, 128), jnp.float32))

        # noobj derived in-kernel (get_target sets noobj = 1 - mask), then the
        # ignore-threshold zeroing.
        noobj = jnp.where(iou_max > thr, 0.0, 1.0 - mask_t)

        # conf BCE in logits form, logit clamped so it equals the reference's
        # eps=1e-7 clipped-probability BCE.
        cr = pred_ref[0, 0, 4]
        zc = jnp.clip(cr, -zmax, zmax)
        bce = (jnp.maximum(zc, 0.0) - mask_t * zc
               + jnp.log(1.0 + jnp.exp(-jnp.abs(zc))))
        lconf = jnp.sum(bce * (mask_t + noobj), axis=0, keepdims=True)

        lyaw = jnp.sum((pred_ref[0, 0, 5] - tmap_ref[0, 0, 6]) ** 2 * mask_t,
                       axis=0, keepdims=True)
        lpit = jnp.sum((pred_ref[0, 0, 6] - tmap_ref[0, 0, 7]) ** 2 * mask_t,
                       axis=0, keepdims=True)
        lrol = jnp.sum((pred_ref[0, 0, 7] - tmap_ref[0, 0, 8]) ** 2 * mask_t,
                       axis=0, keepdims=True)

        # per-(chunk, batch, anchor) sublane partial rows; lane + batch
        # reduction happens in the XLA epilogue.
        out_ref[0, 0, 0, 0:1, :] = lx
        out_ref[0, 0, 0, 1:2, :] = ly
        out_ref[0, 0, 0, 2:3, :] = lw
        out_ref[0, 0, 0, 3:4, :] = lh
        out_ref[0, 0, 0, 4:5, :] = lconf
        out_ref[0, 0, 0, 5:6, :] = lyaw
        out_ref[0, 0, 0, 6:7, :] = lpit
        out_ref[0, 0, 0, 7:8, :] = lrol

    return kernel


# ---------------------------------------------------------------------------
# Wrapper.
# ---------------------------------------------------------------------------
def yolo_loss_forward(x_in, targets, anchors, num_classes, img_size,
                      ignore_threshold=0.5):
    bs, C, in_h, in_w = x_in.shape
    bbox_attrs = 5 + num_classes
    num_anchors = len(anchors)
    assert C == (num_anchors // 3) * bbox_attrs
    HW = in_h * in_w
    # TODO(synk): lane-dense layout assumes H*W is a multiple of 128 (true for
    # 16/32/64 feature levels); ragged levels (13/26/52) would need lane
    # padding plus a validity mask.
    assert HW % 128 == 0
    R_hw = HW // 128

    # Chunk the flattened spatial dim so the per-step live set stays inside the
    # 64-vreg file; chunks obey the (8, 128) BlockSpec rule (multiple of 8 rows
    # or the full extent). Chunks also give v7x extra parallel grid steps.
    if R_hw > 16 and R_hw % 16 == 0:
        Rt = 16
    elif R_hw > 16 and R_hw % 8 == 0:
        Rt = 8
    else:
        Rt = R_hw
    NC = R_hw // Rt

    stride_h = img_size[1] / in_h
    stride_w = img_size[0] / in_w
    scaled_anchors = np.asarray(
        [(aw / stride_w, ah / stride_h) for aw, ah in anchors], np.float32)
    feature_length = [img_size[0] // 32, img_size[0] // 16, img_size[0] // 8]
    idx = feature_length.index(in_w)
    anchor_index = [[0, 1, 2], [3, 4, 5], [6, 7, 8]][idx]
    sa = scaled_anchors[anchor_index]                       # (3, 2)

    # --- prediction slab: NO transpose, only free reshapes + channel slice ---
    # (bs, 3A, H, W) -> (bs, 3, A, HW) -> first 8 channels -> lane-dense tiles
    pred = x_in.reshape(bs, 3, bbox_attrs, HW)[:, :, :8, :]
    pred = pred.reshape(bs, 3, 8, R_hw, 128).astype(jnp.float32)

    # --- target maps from get_target (host scatter); 9 channels:
    #     mask, wm=(2-blsx*blsy)*mask, tx, ty, tw, th, yaw, pitch, roll
    (mask, _noobj, tx, ty, tw, th, _tconf, tyaw, tpitch, troll,
     blsx, blsy) = get_target_np(targets, scaled_anchors, in_w, in_h,
                                 feature_length, num_anchors)
    wm = (2.0 - blsx * blsy) * mask
    # TODO(synk): storing tmap as bf16 would cut v5e/v6e HBM traffic further;
    # kept f32 so the log-space tw/th targets stay bit-close to the reference.
    tmap = np.stack([mask, wm, tx, ty, tw, th, tyaw, tpitch, troll], axis=2)
    tmap = np.ascontiguousarray(tmap.reshape(bs, 3, 9, R_hw, 128), np.float32)

    # --- grid-cell coordinates: constant input; its block index depends only
    #     on the outer chunk axis, so it stays resident across (b, a) steps ---
    gy_flat = np.repeat(np.arange(in_h, dtype=np.float32), in_w)
    gx_flat = np.tile(np.arange(in_w, dtype=np.float32), in_h)
    grid_const = np.stack([gx_flat, gy_flat], axis=0).reshape(2, R_hw, 128)

    # --- GT boxes (grid units, precomputed corners/areas) + per-batch counts ---
    lens = [0 if np.asarray(t).size == 0 else np.asarray(t).shape[0]
            for t in targets]
    T_pad = max(1, max(lens) if lens else 1)
    gt = np.zeros((bs, T_pad, 8), np.float32)
    cnt = np.zeros((bs,), np.int32)
    for b in range(bs):
        t = np.asarray(targets[b], np.float32)
        n = 0 if t.size == 0 else t.shape[0]
        cnt[b] = n
        for i in range(n):
            cx, cy = t[i, 0] * in_w, t[i, 1] * in_h
            ww, hh = t[i, 2] * in_w, t[i, 3] * in_h
            gt[b, i, 0] = cx - 0.5 * ww
            gt[b, i, 1] = cx + 0.5 * ww
            gt[b, i, 2] = cy - 0.5 * hh
            gt[b, i, 3] = cy + 0.5 * hh
            gt[b, i, 4] = ww * hh
    gt_flat = gt.reshape(bs, T_pad * 8)

    kernel = _make_kernel(Rt, sa, float(ignore_threshold))

    # VMEM: double-buffered (8+9+2)*Rt*128*4 B per step (<0.4 MiB at Rt=16) —
    # far below the scoped limit on every generation; no vmem_limit needed.
    out = pl.pallas_call(
        kernel,
        out_shape=jax.ShapeDtypeStruct((NC, bs, 3, 8, 128), jnp.float32),
        grid_spec=pltpu.PrefetchScalarGridSpec(
            num_scalar_prefetch=2,
            grid=(NC, bs, 3),
            in_specs=[
                pl.BlockSpec((1, 1, 8, Rt, 128),
                             lambda c, b, a, cnt_r, gt_r: (b, a, 0, c, 0)),
                pl.BlockSpec((1, 1, 9, Rt, 128),
                             lambda c, b, a, cnt_r, gt_r: (b, a, 0, c, 0)),
                pl.BlockSpec((2, Rt, 128),
                             lambda c, b, a, cnt_r, gt_r: (0, c, 0)),
            ],
            out_specs=pl.BlockSpec((1, 1, 1, 8, 128),
                                   lambda c, b, a, cnt_r, gt_r: (c, b, a, 0, 0)),
        ),
        compiler_params=pltpu.CompilerParams(
            dimension_semantics=("parallel", "parallel", "parallel")),
    )(jnp.asarray(cnt), jnp.asarray(gt_flat), pred,
      jnp.asarray(tmap), jnp.asarray(grid_const))

    comps = jnp.sum(out, axis=(0, 1, 2, 4)) * (1.0 / float(bs))   # (8,)
    total = jnp.sum(comps)   # all lambda_* == 1.0
    return total, comps


# ---------------------------------------------------------------------------
# Pure-numpy reference of YOLOLoss.forward (for verification).
# ---------------------------------------------------------------------------
def reference_forward(x_np, targets, anchors, num_classes, img_size,
                      ignore_threshold=0.5):
    bs, C, in_h, in_w = x_np.shape
    A = 5 + num_classes
    stride_h = img_size[1] / in_h
    stride_w = img_size[0] / in_w
    scaled_anchors = np.asarray(
        [(aw / stride_w, ah / stride_h) for aw, ah in anchors], np.float32)
    feature_length = [img_size[0] // 32, img_size[0] // 16, img_size[0] // 8]

    pred = x_np.reshape(bs, 3, A, in_h, in_w).transpose(0, 1, 3, 4, 2)
    x = _np_sigmoid(pred[..., 0])
    y = _np_sigmoid(pred[..., 1])
    w = pred[..., 2]
    h = pred[..., 3]
    conf = _np_sigmoid(pred[..., 4])
    pyaw, ppitch, proll = pred[..., 5], pred[..., 6], pred[..., 7]

    (mask, noobj, tx, ty, tw, th, _tc, tyaw, tpitch, troll,
     blsx, blsy) = get_target_np(targets, scaled_anchors, in_w, in_h,
                                 feature_length, len(anchors))

    idx = feature_length.index(in_w)
    anchor_index = [[0, 1, 2], [3, 4, 5], [6, 7, 8]][idx]
    sa = scaled_anchors[anchor_index]
    grid_x = np.broadcast_to(np.arange(in_w, dtype=np.float32)[None, None, None, :], x.shape)
    grid_y = np.broadcast_to(np.arange(in_h, dtype=np.float32)[None, None, :, None], y.shape)
    anc_w = np.broadcast_to(sa[:, 0][None, :, None, None], w.shape)
    anc_h = np.broadcast_to(sa[:, 1][None, :, None, None], h.shape)
    pbx = x + grid_x
    pby = y + grid_y
    pbw = np.exp(w) * anc_w
    pbh = np.exp(h) * anc_h

    noobj = noobj.copy()
    for b in range(bs):
        t = np.asarray(targets[b], np.float32)
        if t.size == 0:
            continue
        pb = np.stack([pbx[b].reshape(-1), pby[b].reshape(-1),
                       pbw[b].reshape(-1), pbh[b].reshape(-1)], axis=1)
        gt = np.stack([t[:, 0] * in_w, t[:, 1] * in_h,
                       t[:, 2] * in_w, t[:, 3] * in_h], axis=1)
        ious = _jaccard_np(gt, pb)
        iou_max = ious.max(axis=0).reshape(3, in_h, in_w)
        noobj[b][iou_max > ignore_threshold] = 0.0

    bls = 2.0 - blsx * blsy
    lx = np.sum((x - tx) ** 2 / bs * bls * mask)
    ly = np.sum((y - ty) ** 2 / bs * bls * mask)
    lw = np.sum((w - tw) ** 2 / bs * 0.5 * bls * mask)
    lh = np.sum((h - th) ** 2 / bs * 0.5 * bls * mask)
    eps = 1e-7
    cp = np.clip(conf, eps, 1.0 - eps)
    bce = -mask * np.log(cp) - (1.0 - mask) * np.log(1.0 - cp)
    lconf = np.sum(bce * mask / bs) + np.sum(bce * noobj / bs)
    lyaw = np.sum((pyaw - tyaw) ** 2 / bs * mask)
    lpitch = np.sum((ppitch - tpitch) ** 2 / bs * mask)
    lroll = np.sum((proll - troll) ** 2 / bs * mask)
    comps = np.array([lx, ly, lw, lh, lconf, lyaw, lpitch, lroll], np.float32)
    return float(comps.sum()), comps


if __name__ == "__main__":
    bs = 2
    num_classes = 3                       # bbox_attrs = 8 (x,y,w,h,conf,yaw,pitch,roll)
    img_size = (128, 128)
    in_h = in_w = 16                      # stride 8 feature level -> anchors [6,7,8]
    A = 5 + num_classes
    anchors = [(10, 13), (16, 30), (33, 23), (30, 61), (62, 45),
               (59, 119), (116, 90), (156, 198), (373, 326)]

    key = jax.random.PRNGKey(0)
    k1, k2, k3 = jax.random.split(key, 3)
    x_in = 0.5 * jax.random.normal(k1, (bs, 3 * A, in_h, in_w), jnp.float32)

    def mk_targets(k, n):
        ka, kb, kc = jax.random.split(k, 3)
        xy = jax.random.uniform(ka, (n, 2), minval=0.1, maxval=0.9)
        wh = jax.random.uniform(kb, (n, 2), minval=0.55, maxval=0.95)
        ang = jax.random.uniform(kc, (n, 3), minval=-0.5, maxval=0.5)
        return np.asarray(jnp.concatenate([xy, wh, ang], axis=1), np.float32)

    targets = [mk_targets(k2, 3), mk_targets(k3, 2)]

    total, comps = yolo_loss_forward(x_in, targets, anchors, num_classes, img_size)
    total = jax.block_until_ready(total)
    comps = jax.block_until_ready(comps)

    ref_total, ref_comps = reference_forward(np.asarray(x_in), targets, anchors,
                                             num_classes, img_size)
    np.testing.assert_allclose(np.asarray(comps), ref_comps, rtol=2e-2, atol=2e-2)
    np.testing.assert_allclose(float(total), ref_total, rtol=2e-2, atol=2e-2)
    print("KERNEL_OK")
</pallas_src>

<mosaic_0001>
module attributes {stable_mosaic.version = 11 : i64} {
  func.func @kernel(%arg0: i32, %arg1: i32, %arg2: i32, %arg3: memref<2xi32, #tpu.memory_space<smem>>, %arg4: memref<2x24xf32, #tpu.memory_space<smem>>, %arg5: memref<1x1x8x2x128xf32, #tpu.memory_space<vmem>>, %arg6: memref<1x1x9x2x128xf32, #tpu.memory_space<vmem>>, %arg7: memref<2x2x128xf32, #tpu.memory_space<vmem>>, %arg8: memref<1x1x1x8x128xf32, #tpu.memory_space<vmem>>) attributes {dimension_semantics = [#tpu.dimension_semantics<parallel>, #tpu.dimension_semantics<parallel>, #tpu.dimension_semantics<parallel>], iteration_bounds = array<i64: 1, 2, 3>, scalar_prefetch = 2 : i64, scratch_operands = 0 : i64, tpu.core_type = #tpu.core_type<tc>, window_params = [{transform_indices = @transform_0, window_bounds = array<i64: 1, 1, 8, 2, 128>}, {transform_indices = @transform_1, window_bounds = array<i64: 1, 1, 9, 2, 128>}, {transform_indices = @transform_2, window_bounds = array<i64: 2, 2, 128>}, {transform_indices = @transform_3, window_bounds = array<i64: 1, 1, 1, 8, 128>}]} {
    %c0_i32 = arith.constant 0 : i32
    %0 = arith.cmpi eq, %arg2, %c0_i32 : i32
    %c1_i32 = arith.constant 1 : i32
    %1 = arith.cmpi eq, %arg2, %c1_i32 : i32
    %cst = arith.constant 1.950000e+01 : f32
    %cst_0 = arith.constant 4.662500e+01 : f32
    %2 = arith.select %1, %cst, %cst_0 : f32
    %cst_1 = arith.constant 1.450000e+01 : f32
    %3 = arith.select %0, %cst_1, %2 : f32
    %c0_i32_2 = arith.constant 0 : i32
    %4 = arith.cmpi eq, %arg2, %c0_i32_2 : i32
    %c1_i32_3 = arith.constant 1 : i32
    %5 = arith.cmpi eq, %arg2, %c1_i32_3 : i32
    %cst_4 = arith.constant 2.475000e+01 : f32
    %cst_5 = arith.constant 4.075000e+01 : f32
    %6 = arith.select %5, %cst_4, %cst_5 : f32
    %cst_6 = arith.constant 1.125000e+01 : f32
    %7 = arith.select %4, %cst_6, %6 : f32
    %c0 = arith.constant 0 : index
    %c0_7 = arith.constant 0 : index
    %c0_8 = arith.constant 0 : index
    %c0_9 = arith.constant 0 : index
    %c0_10 = arith.constant 0 : index
    %8 = vector.load %arg5[%c0, %c0_7, %c0_8, %c0_9, %c0_10] : memref<1x1x8x2x128xf32, #tpu.memory_space<vmem>>, vector<1x1x1x2x128xf32>
    %9 = vector.shape_cast %8 : vector<1x1x1x2x128xf32> to vector<2x128xf32>
    %c0_11 = arith.constant 0 : index
    %c0_12 = arith.constant 0 : index
    %c1 = arith.constant 1 : index
    %c0_13 = arith.constant 0 : index
    %c0_14 = arith.constant 0 : index
    %10 = vector.load %arg5[%c0_11, %c0_12, %c1, %c0_13, %c0_14] : memref<1x1x8x2x128xf32, #tpu.memory_space<vmem>>, vector<1x1x1x2x128xf32>
    %11 = vector.shape_cast %10 : vector<1x1x1x2x128xf32> to vector<2x128xf32>
    %c0_15 = arith.constant 0 : index
    %c0_16 = arith.constant 0 : index
    %c2 = arith.constant 2 : index
    %c0_17 = arith.constant 0 : index
    %c0_18 = arith.constant 0 : index
    %12 = vector.load %arg5[%c0_15, %c0_16, %c2, %c0_17, %c0_18] : memref<1x1x8x2x128xf32, #tpu.memory_space<vmem>>, vector<1x1x1x2x128xf32>
    %13 = vector.shape_cast %12 : vector<1x1x1x2x128xf32> to vector<2x128xf32>
    %c0_19 = arith.constant 0 : index
    %c0_20 = arith.constant 0 : index
    %c3 = arith.constant 3 : index
    %c0_21 = arith.constant 0 : index
    %c0_22 = arith.constant 0 : index
    %14 = vector.load %arg5[%c0_19, %c0_20, %c3, %c0_21, %c0_22] : memref<1x1x8x2x128xf32, #tpu.memory_space<vmem>>, vector<1x1x1x2x128xf32>
    %15 = vector.shape_cast %14 : vector<1x1x1x2x128xf32> to vector<2x128xf32>
    %cst_23 = arith.constant 5.000000e-01 : f32
    %16 = vector.broadcast %cst_23 : f32 to vector<2x128xf32>
    %17 = arith.mulf %16, %9 : vector<2x128xf32>
    %18 = math.tanh %17 : vector<2x128xf32>
    %cst_24 = arith.constant 5.000000e-01 : f32
    %19 = vector.broadcast %cst_24 : f32 to vector<2x128xf32>
    %20 = arith.mulf %19, %18 : vector<2x128xf32>
    %cst_25 = arith.constant 5.000000e-01 : f32
    %21 = vector.broadcast %cst_25 : f32 to vector<2x128xf32>
    %22 = arith.addf %20, %21 : vector<2x128xf32>
    %cst_26 = arith.constant 5.000000e-01 : f32
    %23 = vector.broadcast %cst_26 : f32 to vector<2x128xf32>
    %24 = arith.mulf %23, %11 : vector<2x128xf32>
    %25 = math.tanh %24 : vector<2x128xf32>
    %cst_27 = arith.constant 5.000000e-01 : f32
    %26 = vector.broadcast %cst_27 : f32 to vector<2x128xf32>
    %27 = arith.mulf %26, %25 : vector<2x128xf32>
    %cst_28 = arith.constant 5.000000e-01 : f32
    %28 = vector.broadcast %cst_28 : f32 to vector<2x128xf32>
    %29 = arith.addf %27, %28 : vector<2x128xf32>
    %c0_29 = arith.constant 0 : index
    %c0_30 = arith.constant 0 : index
    %c0_31 = arith.constant 0 : index
    %30 = vector.load %arg7[%c0_29, %c0_30, %c0_31] : memref<2x2x128xf32, #tpu.memory_space<vmem>>, vector<1x2x128xf32>
    %31 = vector.shape_cast %30 : vector<1x2x128xf32> to vector<2x128xf32>
    %c1_32 = arith.constant 1 : index
    %c0_33 = arith.constant 0 : index
    %c0_34 = arith.constant 0 : index
    %32 = vector.load %arg7[%c1_32, %c0_33, %c0_34] : memref<2x2x128xf32, #tpu.memory_space<vmem>>, vector<1x2x128xf32>
    %33 = vector.shape_cast %32 : vector<1x2x128xf32> to vector<2x128xf32>
    %cst_35 = arith.constant -3.000000e+01 : f32
    %cst_36 = arith.constant 3.000000e+01 : f32
    %34 = vector.broadcast %cst_35 : f32 to vector<2x128xf32>
    %35 = arith.maximumf %34, %13 : vector<2x128xf32>
    %36 = vector.broadcast %cst_36 : f32 to vector<2x128xf32>
    %37 = arith.minimumf %36, %35 : vector<2x128xf32>
    %38 = math.exp %37 : vector<2x128xf32>
    %39 = vector.broadcast %3 : f32 to vector<2x128xf32>
    %40 = arith.mulf %38, %39 : vector<2x128xf32>
    %cst_37 = arith.constant -3.000000e+01 : f32
    %cst_38 = arith.constant 3.000000e+01 : f32
    %41 = vector.broadcast %cst_37 : f32 to vector<2x128xf32>
    %42 = arith.maximumf %41, %15 : vector<2x128xf32>
    %43 = vector.broadcast %cst_38 : f32 to vector<2x128xf32>
    %44 = arith.minimumf %43, %42 : vector<2x128xf32>
    %45 = math.exp %44 : vector<2x128xf32>
    %46 = vector.broadcast %7 : f32 to vector<2x128xf32>
    %47 = arith.mulf %45, %46 : vector<2x128xf32>
    %48 = arith.addf %22, %31 : vector<2x128xf32>
    %49 = arith.addf %29, %33 : vector<2x128xf32>
    %cst_39 = arith.constant 5.000000e-01 : f32
    %50 = vector.broadcast %cst_39 : f32 to vector<2x128xf32>
    %51 = arith.mulf %50, %40 : vector<2x128xf32>
    %52 = arith.subf %48, %51 : vector<2x128xf32>
    %cst_40 = arith.constant 5.000000e-01 : f32
    %53 = vector.broadcast %cst_40 : f32 to vector<2x128xf32>
    %54 = arith.mulf %53, %40 : vector<2x128xf32>
    %55 = arith.addf %48, %54 : vector<2x128xf32>
    %cst_41 = arith.constant 5.000000e-01 : f32
    %56 = vector.broadcast %cst_41 : f32 to vector<2x128xf32>
    %57 = arith.mulf %56, %47 : vector<2x128xf32>
    %58 = arith.subf %49, %57 : vector<2x128xf32>
    %cst_42 = arith.constant 5.000000e-01 : f32
    %59 = vector.broadcast %cst_42 : f32 to vector<2x128xf32>
    %60 = arith.mulf %59, %47 : vector<2x128xf32>
    %61 = arith.addf %49, %60 : vector<2x128xf32>
    %62 = arith.mulf %40, %47 : vector<2x128xf32>
    %c0_43 = arith.constant 0 : index
    %c0_44 = arith.constant 0 : index
    %c0_45 = arith.constant 0 : index
    %c0_46 = arith.constant 0 : index
    %c0_47 = arith.constant 0 : index
    %63 = vector.load %arg6[%c0_43, %c0_44, %c0_45, %c0_46, %c0_47] : memref<1x1x9x2x128xf32, #tpu.memory_space<vmem>>, vector<1x1x1x2x128xf32>
    %64 = vector.shape_cast %63 : vector<1x1x1x2x128xf32> to vector<2x128xf32>
    %c0_48 = arith.constant 0 : index
    %c0_49 = arith.constant 0 : index
    %c1_50 = arith.constant 1 : index
    %c0_51 = arith.constant 0 : index
    %c0_52 = arith.constant 0 : index
    %65 = vector.load %arg6[%c0_48, %c0_49, %c1_50, %c0_51, %c0_52] : memref<1x1x9x2x128xf32, #tpu.memory_space<vmem>>, vector<1x1x1x2x128xf32>
    %66 = vector.shape_cast %65 : vector<1x1x1x2x128xf32> to vector<2x128xf32>
    %c0_53 = arith.constant 0 : index
    %c0_54 = arith.constant 0 : index
    %c2_55 = arith.constant 2 : index
    %c0_56 = arith.constant 0 : index
    %c0_57 = arith.constant 0 : index
    %67 = vector.load %arg6[%c0_53, %c0_54, %c2_55, %c0_56, %c0_57] : memref<1x1x9x2x128xf32, #tpu.memory_space<vmem>>, vector<1x1x1x2x128xf32>
    %68 = vector.shape_cast %67 : vector<1x1x1x2x128xf32> to vector<2x128xf32>
    %69 = arith.subf %22, %68 : vector<2x128xf32>
    %70 = arith.mulf %69, %69 : vector<2x128xf32>
    %71 = arith.mulf %70, %66 : vector<2x128xf32>
    %cst_58 = arith.constant dense<0.000000e+00> : vector<128xf32>
    %72 = vector.multi_reduction <add>, %71, %cst_58 [0] : vector<2x128xf32> to vector<128xf32>
    %73 = vector.shape_cast %72 : vector<128xf32> to vector<1x128xf32>
    %c0_59 = arith.constant 0 : index
    %c0_60 = arith.constant 0 : index
    %c3_61 = arith.constant 3 : index
    %c0_62 = arith.constant 0 : index
    %c0_63 = arith.constant 0 : index
    %74 = vector.load %arg6[%c0_59, %c0_60, %c3_61, %c0_62, %c0_63] : memref<1x1x9x2x128xf32, #tpu.memory_space<vmem>>, vector<1x1x1x2x128xf32>
    %75 = vector.shape_cast %74 : vector<1x1x1x2x128xf32> to vector<2x128xf32>
    %76 = arith.subf %29, %75 : vector<2x128xf32>
    %77 = arith.mulf %76, %76 : vector<2x128xf32>
    %78 = arith.mulf %77, %66 : vector<2x128xf32>
    %cst_64 = arith.constant dense<0.000000e+00> : vector<128xf32>
    %79 = vector.multi_reduction <add>, %78, %cst_64 [0] : vector<2x128xf32> to vector<128xf32>
    %80 = vector.shape_cast %79 : vector<128xf32> to vector<1x128xf32>
    %c0_65 = arith.constant 0 : index
    %c0_66 = arith.constant 0 : index
    %c4 = arith.constant 4 : index
    %c0_67 = arith.constant 0 : index
    %c0_68 = arith.constant 0 : index
    %81 = vector.load %arg6[%c0_65, %c0_66, %c4, %c0_67, %c0_68] : memref<1x1x9x2x128xf32, #tpu.memory_space<vmem>>, vector<1x1x1x2x128xf32>
    %82 = vector.shape_cast %81 : vector<1x1x1x2x128xf32> to vector<2x128xf32>
    %83 = arith.subf %13, %82 : vector<2x128xf32>
    %84 = arith.mulf %83, %83 : vector<2x128xf32>
    %cst_69 = arith.constant 5.000000e-01 : f32
    %85 = vector.broadcast %cst_69 : f32 to vector<2x128xf32>
    %86 = arith.mulf %85, %66 : vector<2x128xf32>
    %87 = arith.mulf %84, %86 : vector<2x128xf32>
    %cst_70 = arith.constant dense<0.000000e+00> : vector<128xf32>
    %88 = vector.multi_reduction <add>, %87, %cst_70 [0] : vector<2x128xf32> to vector<128xf32>
    %89 = vector.shape_cast %88 : vector<128xf32> to vector<1x128xf32>
    %c0_71 = arith.constant 0 : index
    %c0_72 = arith.constant 0 : index
    %c5 = arith.constant 5 : index
    %c0_73 = arith.constant 0 : index
    %c0_74 = arith.constant 0 : index
    %90 = vector.load %arg6[%c0_71, %c0_72, %c5, %c0_73, %c0_74] : memref<1x1x9x2x128xf32, #tpu.memory_space<vmem>>, vector<1x1x1x2x128xf32>
    %91 = vector.shape_cast %90 : vector<1x1x1x2x128xf32> to vector<2x128xf32>
    %92 = arith.subf %15, %91 : vector<2x128xf32>
    %93 = arith.mulf %92, %92 : vector<2x128xf32>
    %cst_75 = arith.constant 5.000000e-01 : f32
    %94 = vector.broadcast %cst_75 : f32 to vector<2x128xf32>
    %95 = arith.mulf %94, %66 : vector<2x128xf32>
    %96 = arith.mulf %93, %95 : vector<2x128xf32>
    %cst_76 = arith.constant dense<0.000000e+00> : vector<128xf32>
    %97 = vector.multi_reduction <add>, %96, %cst_76 [0] : vector<2x128xf32> to vector<128xf32>
    %98 = vector.shape_cast %97 : vector<128xf32> to vector<1x128xf32>
    %99 = arith.index_cast %arg1 : i32 to index
    %100 = memref.load %arg3[%99] : memref<2xi32, #tpu.memory_space<smem>>
    %cst_77 = arith.constant 0.000000e+00 : f32
    %101 = vector.broadcast %cst_77 : f32 to vector<2x128xf32>
    %c0_i32_78 = arith.constant 0 : i32
    %102 = arith.subi %100, %c0_i32_78 : i32
    %103 = arith.addi %c0_i32_78, %102 : i32
    %c1_i32_79 = arith.constant 1 : i32
    %104 = scf.for %arg9 = %c0_i32_78 to %103 step %c1_i32_79 iter_args(%arg10 = %101) -> (vector<2x128xf32>)  : i32 {
      %c8_i32 = arith.constant 8 : i32
      %184 = arith.muli %arg9, %c8_i32 : i32
      %c0_i32_164 = arith.constant 0 : i32
      %185 = arith.addi %184, %c0_i32_164 : i32
      %186 = arith.index_cast %arg1 : i32 to index
      %187 = arith.index_cast %185 : i32 to index
      %188 = memref.load %arg4[%186, %187] : memref<2x24xf32, #tpu.memory_space<smem>>
      %c1_i32_165 = arith.constant 1 : i32
      %189 = arith.addi %184, %c1_i32_165 : i32
      %190 = arith.index_cast %arg1 : i32 to index
      %191 = arith.index_cast %189 : i32 to index
      %192 = memref.load %arg4[%190, %191] : memref<2x24xf32, #tpu.memory_space<smem>>
      %c2_i32 = arith.constant 2 : i32
      %193 = arith.addi %184, %c2_i32 : i32
      %194 = arith.index_cast %arg1 : i32 to index
      %195 = arith.index_cast %193 : i32 to index
      %196 = memref.load %arg4[%194, %195] : memref<2x24xf32, #tpu.memory_space<smem>>
      %c3_i32 = arith.constant 3 : i32
      %197 = arith.addi %184, %c3_i32 : i32
      %198 = arith.index_cast %arg1 : i32 to index
      %199 = arith.index_cast %197 : i32 to index
      %200 = memref.load %arg4[%198, %199] : memref<2x24xf32, #tpu.memory_space<smem>>
      %c4_i32 = arith.constant 4 : i32
      %201 = arith.addi %184, %c4_i32 : i32
      %202 = arith.index_cast %arg1 : i32 to index
      %203 = arith.index_cast %201 : i32 to index
      %204 = memref.load %arg4[%202, %203] : memref<2x24xf32, #tpu.memory_space<smem>>
      %205 = vector.broadcast %192 : f32 to vector<2x128xf32>
      %206 = arith.minimumf %55, %205 : vector<2x128xf32>
      %207 = vector.broadcast %188 : f32 to vector<2x128xf32>
      %208 = arith.maximumf %52, %207 : vector<2x128xf32>
      %209 = arith.subf %206, %208 : vector<2x128xf32>
      %cst_166 = arith.constant 0.000000e+00 : f32
      %210 = vector.broadcast %cst_166 : f32 to vector<2x128xf32>
      %211 = arith.maximumf %209, %210 : vector<2x128xf32>
      %212 = vector.broadcast %200 : f32 to vector<2x128xf32>
      %213 = arith.minimumf %61, %212 : vector<2x128xf32>
      %214 = vector.broadcast %196 : f32 to vector<2x128xf32>
      %215 = arith.maximumf %58, %214 : vector<2x128xf32>
      %216 = arith.subf %213, %215 : vector<2x128xf32>
      %cst_167 = arith.constant 0.000000e+00 : f32
      %217 = vector.broadcast %cst_167 : f32 to vector<2x128xf32>
      %218 = arith.maximumf %216, %217 : vector<2x128xf32>
      %219 = arith.mulf %211, %218 : vector<2x128xf32>
      %220 = vector.broadcast %204 : f32 to vector<2x128xf32>
      %221 = arith.addf %220, %62 : vector<2x128xf32>
      %222 = arith.subf %221, %219 : vector<2x128xf32>
      %223 = arith.divf %219, %222 : vector<2x128xf32>
      %224 = arith.maximumf %arg10, %223 : vector<2x128xf32>
      scf.yield %224 : vector<2x128xf32>
    }
    %cst_80 = arith.constant 5.000000e-01 : f32
    %105 = vector.broadcast %cst_80 : f32 to vector<2x128xf32>
    %106 = arith.cmpf ogt, %104, %105 : vector<2x128xf32>
    %cst_81 = arith.constant 1.000000e+00 : f32
    %107 = vector.broadcast %cst_81 : f32 to vector<2x128xf32>
    %108 = arith.subf %107, %64 : vector<2x128xf32>
    %cst_82 = arith.constant 0.000000e+00 : f32
    %109 = vector.broadcast %cst_82 : f32 to vector<2x128xf32>
    %110 = arith.select %106, %109, %108 : vector<2x128xi1>, vector<2x128xf32>
    %c0_83 = arith.constant 0 : index
    %c0_84 = arith.constant 0 : index
    %c4_85 = arith.constant 4 : index
    %c0_86 = arith.constant 0 : index
    %c0_87 = arith.constant 0 : index
    %111 = vector.load %arg5[%c0_83, %c0_84, %c4_85, %c0_86, %c0_87] : memref<1x1x8x2x128xf32, #tpu.memory_space<vmem>>, vector<1x1x1x2x128xf32>
    %112 = vector.shape_cast %111 : vector<1x1x1x2x128xf32> to vector<2x128xf32>
    %cst_88 = arith.constant -16.1180954 : f32
    %cst_89 = arith.constant 16.1180954 : f32
    %113 = vector.broadcast %cst_88 : f32 to vector<2x128xf32>
    %114 = arith.maximumf %113, %112 : vector<2x128xf32>
    %115 = vector.broadcast %cst_89 : f32 to vector<2x128xf32>
    %116 = arith.minimumf %115, %114 : vector<2x128xf32>
    %cst_90 = arith.constant 0.000000e+00 : f32
    %117 = vector.broadcast %cst_90 : f32 to vector<2x128xf32>
    %118 = arith.maximumf %116, %117 : vector<2x128xf32>
    %119 = arith.mulf %64, %116 : vector<2x128xf32>
    %120 = arith.subf %118, %119 : vector<2x128xf32>
    %121 = math.absf %116 : vector<2x128xf32>
    %cst_91 = arith.constant 0.000000e+00 : f32
    %122 = vector.broadcast %cst_91 : f32 to vector<2x128xf32>
    %123 = arith.subf %122, %121 : vector<2x128xf32>
    %124 = math.exp %123 : vector<2x128xf32>
    %cst_92 = arith.constant 1.000000e+00 : f32
    %125 = vector.broadcast %cst_92 : f32 to vector<2x128xf32>
    %126 = arith.addf %125, %124 : vector<2x128xf32>
    %127 = math.log %126 : vector<2x128xf32>
    %128 = arith.addf %120, %127 : vector<2x128xf32>
    %129 = arith.addf %64, %110 : vector<2x128xf32>
    %130 = arith.mulf %128, %129 : vector<2x128xf32>
    %cst_93 = arith.constant dense<0.000000e+00> : vector<128xf32>
    %131 = vector.multi_reduction <add>, %130, %cst_93 [0] : vector<2x128xf32> to vector<128xf32>
    %132 = vector.shape_cast %131 : vector<128xf32> to vector<1x128xf32>
    %c0_94 = arith.constant 0 : index
    %c0_95 = arith.constant 0 : index
    %c5_96 = arith.constant 5 : index
    %c0_97 = arith.constant 0 : index
    %c0_98 = arith.constant 0 : index
    %133 = vector.load %arg5[%c0_94, %c0_95, %c5_96, %c0_97, %c0_98] : memref<1x1x8x2x128xf32, #tpu.memory_space<vmem>>, vector<1x1x1x2x128xf32>
    %134 = vector.shape_cast %133 : vector<1x1x1x2x128xf32> to vector<2x128xf32>
    %c0_99 = arith.constant 0 : index
    %c0_100 = arith.constant 0 : index
    %c6 = arith.constant 6 : index
    %c0_101 = arith.constant 0 : index
    %c0_102 = arith.constant 0 : index
    %135 = vector.load %arg6[%c0_99, %c0_100, %c6, %c0_101, %c0_102] : memref<1x1x9x2x128xf32, #tpu.memory_space<vmem>>, vector<1x1x1x2x128xf32>
    %136 = vector.shape_cast %135 : vector<1x1x1x2x128xf32> to vector<2x128xf32>
    %137 = arith.subf %134, %136 : vector<2x128xf32>
    %138 = arith.mulf %137, %137 : vector<2x128xf32>
    %139 = arith.mulf %138, %64 : vector<2x128xf32>
    %cst_103 = arith.constant dense<0.000000e+00> : vector<128xf32>
    %140 = vector.multi_reduction <add>, %139, %cst_103 [0] : vector<2x128xf32> to vector<128xf32>
    %141 = vector.shape_cast %140 : vector<128xf32> to vector<1x128xf32>
    %c0_104 = arith.constant 0 : index
    %c0_105 = arith.constant 0 : index
    %c6_106 = arith.constant 6 : index
    %c0_107 = arith.constant 0 : index
    %c0_108 = arith.constant 0 : index
    %142 = vector.load %arg5[%c0_104, %c0_105, %c6_106, %c0_107, %c0_108] : memref<1x1x8x2x128xf32, #tpu.memory_space<vmem>>, vector<1x1x1x2x128xf32>
    %143 = vector.shape_cast %142 : vector<1x1x1x2x128xf32> to vector<2x128xf32>
    %c0_109 = arith.constant 0 : index
    %c0_110 = arith.constant 0 : index
    %c7 = arith.constant 7 : index
    %c0_111 = arith.constant 0 : index
    %c0_112 = arith.constant 0 : index
    %144 = vector.load %arg6[%c0_109, %c0_110, %c7, %c0_111, %c0_112] : memref<1x1x9x2x128xf32, #tpu.memory_space<vmem>>, vector<1x1x1x2x128xf32>
    %145 = vector.shape_cast %144 : vector<1x1x1x2x128xf32> to vector<2x128xf32>
    %146 = arith.subf %143, %145 : vector<2x128xf32>
    %147 = arith.mulf %146, %146 : vector<2x128xf32>
    %148 = arith.mulf %147, %64 : vector<2x128xf32>
    %cst_113 = arith.constant dense<0.000000e+00> : vector<128xf32>
    %149 = vector.multi_reduction <add>, %148, %cst_113 [0] : vector<2x128xf32> to vector<128xf32>
    %150 = vector.shape_cast %149 : vector<128xf32> to vector<1x128xf32>
    %c0_114 = arith.constant 0 : index
    %c0_115 = arith.constant 0 : index
    %c7_116 = arith.constant 7 : index
    %c0_117 = arith.constant 0 : index
    %c0_118 = arith.constant 0 : index
    %151 = vector.load %arg5[%c0_114, %c0_115, %c7_116, %c0_117, %c0_118] : memref<1x1x8x2x128xf32, #tpu.memory_space<vmem>>, vector<1x1x1x2x128xf32>
    %152 = vector.shape_cast %151 : vector<1x1x1x2x128xf32> to vector<2x128xf32>
    %c0_119 = arith.constant 0 : index
    %c0_120 = arith.constant 0 : index
    %c8 = arith.constant 8 : index
    %c0_121 = arith.constant 0 : index
    %c0_122 = arith.constant 0 : index
    %153 = vector.load %arg6[%c0_119, %c0_120, %c8, %c0_121, %c0_122] : memref<1x1x9x2x128xf32, #tpu.memory_space<vmem>>, vector<1x1x1x2x128xf32>
    %154 = vector.shape_cast %153 : vector<1x1x1x2x128xf32> to vector<2x128xf32>
    %155 = arith.subf %152, %154 : vector<2x128xf32>
    %156 = arith.mulf %155, %155 : vector<2x128xf32>
    %157 = arith.mulf %156, %64 : vector<2x128xf32>
    %cst_123 = arith.constant dense<0.000000e+00> : vector<128xf32>
    %158 = vector.multi_reduction <add>, %157, %cst_123 [0] : vector<2x128xf32> to vector<128xf32>
    %159 = vector.shape_cast %158 : vector<128xf32> to vector<1x128xf32>
    %c0_124 = arith.constant 0 : index
    %c0_125 = arith.constant 0 : index
    %c0_126 = arith.constant 0 : index
    %c0_127 = arith.constant 0 : index
    %c0_128 = arith.constant 0 : index
    %160 = vector.load %arg8[%c0_124, %c0_125, %c0_126, %c0_127, %c0_128] : memref<1x1x1x8x128xf32, #tpu.memory_space<vmem>>, vector<1x1x1x1x128xf32>
    %161 = vector.shape_cast %160 : vector<1x1x1x1x128xf32> to vector<1x128xf32>
    %162 = vector.shape_cast %73 : vector<1x128xf32> to vector<1x1x1x1x128xf32>
    tpu.vector_store %arg8[%c0_124, %c0_125, %c0_126, %c0_127, %c0_128], %162 {strides = array<i32>} : memref<1x1x1x8x128xf32, #tpu.memory_space<vmem>>, vector<1x1x1x1x128xf32>,
    %c0_129 = arith.constant 0 : index
    %c0_130 = arith.constant 0 : index
    %c0_131 = arith.constant 0 : index
    %c1_132 = arith.constant 1 : index
    %c0_133 = arith.constant 0 : index
    %163 = vector.load %arg8[%c0_129, %c0_130, %c0_131, %c1_132, %c0_133] : memref<1x1x1x8x128xf32, #tpu.memory_space<vmem>>, vector<1x1x1x1x128xf32>
    %164 = vector.shape_cast %163 : vector<1x1x1x1x128xf32> to vector<1x128xf32>
    %165 = vector.shape_cast %80 : vector<1x128xf32> to vector<1x1x1x1x128xf32>
    tpu.vector_store %arg8[%c0_129, %c0_130, %c0_131, %c1_132, %c0_133], %165 {strides = array<i32>} : memref<1x1x1x8x128xf32, #tpu.memory_space<vmem>>, vector<1x1x1x1x128xf32>,
    %c0_134 = arith.constant 0 : index
    %c0_135 = arith.constant 0 : index
    %c0_136 = arith.constant 0 : index
    %c2_137 = arith.constant 2 : index
    %c0_138 = arith.constant 0 : index
    %166 = vector.load %arg8[%c0_134, %c0_135, %c0_136, %c2_137, %c0_138] : memref<1x1x1x8x128xf32, #tpu.memory_space<vmem>>, vector<1x1x1x1x128xf32>
    %167 = vector.shape_cast %166 : vector<1x1x1x1x128xf32> to vector<1x128xf32>
    %168 = vector.shape_cast %89 : vector<1x128xf32> to vector<1x1x1x1x128xf32>
    tpu.vector_store %arg8[%c0_134, %c0_135, %c0_136, %c2_137, %c0_138], %168 {strides = array<i32>} : memref<1x1x1x8x128xf32, #tpu.memory_space<vmem>>, vector<1x1x1x1x128xf32>,
    %c0_139 = arith.constant 0 : index
    %c0_140 = arith.constant 0 : index
    %c0_141 = arith.constant 0 : index
    %c3_142 = arith.constant 3 : index
    %c0_143 = arith.constant 0 : index
    %169 = vector.load %arg8[%c0_139, %c0_140, %c0_141, %c3_142, %c0_143] : memref<1x1x1x8x128xf32, #tpu.memory_space<vmem>>, vector<1x1x1x1x128xf32>
    %170 = vector.shape_cast %169 : vector<1x1x1x1x128xf32> to vector<1x128xf32>
    %171 = vector.shape_cast %98 : vector<1x128xf32> to vector<1x1x1x1x128xf32>
    tpu.vector_store %arg8[%c0_139, %c0_140, %c0_141, %c3_142, %c0_143], %171 {strides = array<i32>} : memref<1x1x1x8x128xf32, #tpu.memory_space<vmem>>, vector<1x1x1x1x128xf32>,
    %c0_144 = arith.constant 0 : index
    %c0_145 = arith.constant 0 : index
    %c0_146 = arith.constant 0 : index
    %c4_147 = arith.constant 4 : index
    %c0_148 = arith.constant 0 : index
    %172 = vector.load %arg8[%c0_144, %c0_145, %c0_146, %c4_147, %c0_148] : memref<1x1x1x8x128xf32, #tpu.memory_space<vmem>>, vector<1x1x1x1x128xf32>
    %173 = vector.shape_cast %172 : vector<1x1x1x1x128xf32> to vector<1x128xf32>
    %174 = vector.shape_cast %132 : vector<1x128xf32> to vector<1x1x1x1x128xf32>
    tpu.vector_store %arg8[%c0_144, %c0_145, %c0_146, %c4_147, %c0_148], %174 {strides = array<i32>} : memref<1x1x1x8x128xf32, #tpu.memory_space<vmem>>, vector<1x1x1x1x128xf32>,
    %c0_149 = arith.constant 0 : index
    %c0_150 = arith.constant 0 : index
    %c0_151 = arith.constant 0 : index
    %c5_152 = arith.constant 5 : index
    %c0_153 = arith.constant 0 : index
    %175 = vector.load %arg8[%c0_149, %c0_150, %c0_151, %c5_152, %c0_153] : memref<1x1x1x8x128xf32, #tpu.memory_space<vmem>>, vector<1x1x1x1x128xf32>
    %176 = vector.shape_cast %175 : vector<1x1x1x1x128xf32> to vector<1x128xf32>
    %177 = vector.shape_cast %141 : vector<1x128xf32> to vector<1x1x1x1x128xf32>
    tpu.vector_store %arg8[%c0_149, %c0_150, %c0_151, %c5_152, %c0_153], %177 {strides = array<i32>} : memref<1x1x1x8x128xf32, #tpu.memory_space<vmem>>, vector<1x1x1x1x128xf32>,
    %c0_154 = arith.constant 0 : index
    %c0_155 = arith.constant 0 : index
    %c0_156 = arith.constant 0 : index
    %c6_157 = arith.constant 6 : index
    %c0_158 = arith.constant 0 : index
    %178 = vector.load %arg8[%c0_154, %c0_155, %c0_156, %c6_157, %c0_158] : memref<1x1x1x8x128xf32, #tpu.memory_space<vmem>>, vector<1x1x1x1x128xf32>
    %179 = vector.shape_cast %178 : vector<1x1x1x1x128xf32> to vector<1x128xf32>
    %180 = vector.shape_cast %150 : vector<1x128xf32> to vector<1x1x1x1x128xf32>
    tpu.vector_store %arg8[%c0_154, %c0_155, %c0_156, %c6_157, %c0_158], %180 {strides = array<i32>} : memref<1x1x1x8x128xf32, #tpu.memory_space<vmem>>, vector<1x1x1x1x128xf32>,
    %c0_159 = arith.constant 0 : index
    %c0_160 = arith.constant 0 : index
    %c0_161 = arith.constant 0 : index
    %c7_162 = arith.constant 7 : index
    %c0_163 = arith.constant 0 : index
    %181 = vector.load %arg8[%c0_159, %c0_160, %c0_161, %c7_162, %c0_163] : memref<1x1x1x8x128xf32, #tpu.memory_space<vmem>>, vector<1x1x1x1x128xf32>
    %182 = vector.shape_cast %181 : vector<1x1x1x1x128xf32> to vector<1x128xf32>
    %183 = vector.shape_cast %159 : vector<1x128xf32> to vector<1x1x1x1x128xf32>
    tpu.vector_store %arg8[%c0_159, %c0_160, %c0_161, %c7_162, %c0_163], %183 {strides = array<i32>} : memref<1x1x1x8x128xf32, #tpu.memory_space<vmem>>, vector<1x1x1x1x128xf32>,
    return
  }
  func.func @transform_0(%arg0: i32, %arg1: i32, %arg2: i32, %arg3: memref<2xi32, #tpu.memory_space<smem>>, %arg4: memref<2x24xf32, #tpu.memory_space<smem>>) -> (i32, i32, i32, i32, i32) {
    %c0_i32 = arith.constant 0 : i32
    %c0_i32_0 = arith.constant 0 : i32
    %c0_i32_1 = arith.constant 0 : i32
    return %arg1, %arg2, %c0_i32, %arg0, %c0_i32_0 : i32, i32, i32, i32, i32
  }
  func.func @transform_1(%arg0: i32, %arg1: i32, %arg2: i32, %arg3: memref<2xi32, #tpu.memory_space<smem>>, %arg4: memref<2x24xf32, #tpu.memory_space<smem>>) -> (i32, i32, i32, i32, i32) {
    %c0_i32 = arith.constant 0 : i32
    %c0_i32_0 = arith.constant 0 : i32
    %c0_i32_1 = arith.constant 0 : i32
    return %arg1, %arg2, %c0_i32, %arg0, %c0_i32_0 : i32, i32, i32, i32, i32
  }
  func.func @transform_2(%arg0: i32, %arg1: i32, %arg2: i32, %arg3: memref<2xi32, #tpu.memory_space<smem>>, %arg4: memref<2x24xf32, #tpu.memory_space<smem>>) -> (i32, i32, i32) {
    %c0_i32 = arith.constant 0 : i32
    %c0_i32_0 = arith.constant 0 : i32
    %c0_i32_1 = arith.constant 0 : i32
    return %c0_i32, %arg0, %c0_i32_0 : i32, i32, i32
  }
  func.func @transform_3(%arg0: i32, %arg1: i32, %arg2: i32, %arg3: memref<2xi32, #tpu.memory_space<smem>>, %arg4: memref<2x24xf32, #tpu.memory_space<smem>>) -> (i32, i32, i32, i32, i32) {
    %c0_i32 = arith.constant 0 : i32
    %c0_i32_0 = arith.constant 0 : i32
    %c0_i32_1 = arith.constant 0 : i32
    return %arg0, %arg1, %arg2, %c0_i32, %c0_i32_0 : i32, i32, i32, i32, i32
  }
}

</mosaic_0001>

<llo_original>
// kernel: tpu_custom_call.1
$region0: #{tpu_custom_call.1}
  #allocation0 [shape = 'u32[]', space=smem, size = 0x4, offset = 0x4, fixed_abs, tag = 'smem constant byte address 0x4 - core index']
  #allocation1 [shape = 'u32[144,128]{1,0:T(1,128)}', space=vmem, size = 0x12000, scoped, tag = 'internal scratch']
  #allocation2 [shape = 's32[1]{0}', space=sflag, size = 0x4, scoped, tag = 'scoped memory for tpu_custom_call.1']
  #allocation3 [shape = 'u8[512]{0}', space=smem, size = 0x200, scoped, tag = 'prefetched SMEM operand 0']
  #allocation4 [shape = 'u8[1024]{0}', space=smem, size = 0x400, scoped, tag = 'prefetched SMEM operand 1']
  %s0 = inlined_call_operand.hbm [shape: s32[2], index: 0, kind: input, shape index: {}]
  %s1 = inlined_call_operand.hbm [shape: f32[2,24], index: 1, kind: input, shape index: {}]
  %s2 = inlined_call_operand.hbm [shape: f32[2,3,8,2,128], index: 2, kind: input, shape index: {}]
  %s3 = inlined_call_operand.hbm [shape: f32[2,3,9,2,128], index: 3, kind: input, shape index: {}]
  %s4 = inlined_call_operand.vmem [shape: f32[2,2,128], index: 4, kind: input, shape index: {}]
  %s5 = inlined_call_operand.hbm [shape: f32[1,2,3,8,128], index: 5, kind: output, shape index: {}]
  %s6 = sld [smem:[#allocation0]]
  $region60: #{tpu_custom_call.1} parent=0
    _
  %s8 = ssub.s32 1, %s6
  %s9 = scalar_select 0, %s8, %s6
  %11 = dma.hbm_to_smem %s0, 16, [#allocation3], [#allocation2]
  %13 = dma.hbm_to_smem %s1, 32, [#allocation4], [#allocation2]
  %14 = dma.done [#allocation2], 48
  %15 = sfence
  $region1: #{tpu_custom_call.1} parent=0
    #allocation5 [shape = 'u8[16384]{0}', space=vmem, size = 0x4000, scoped, tag = 'input window, operand 2']
    #allocation6 [shape = 's32[2]{0}', space=sflag, size = 0x8, scoped, tag = 'scoped memory for tpu_custom_call.1']
    #allocation7 [shape = 's32[2]{0}', space=sflag, size = 0x8, scoped, tag = 'scoped memory for tpu_custom_call.1']
    #allocation8 [shape = 'u8[18432]{0}', space=vmem, size = 0x4800, scoped, tag = 'input window, operand 3']
    #allocation9 [shape = 's32[2]{0}', space=sflag, size = 0x8, scoped, tag = 'scoped memory for tpu_custom_call.1']
    #allocation10 [shape = 'u8[8192]{0}', space=vmem, size = 0x2000, scoped, tag = 'output window, operand 0']
    %16 = vsyncpa [#allocation6], 0
    %s17 = scalar_lea.sflag [#allocation6], 1
    %18 = vsyncpa %s17, 0
    %19 = vsyncpa [#allocation9], 0
    %s20 = scalar_lea.sflag [#allocation9], 1
    %21 = vsyncpa %s20, 0
    %22 = vsyncpa [#allocation7], 0
    %s23 = scalar_lea.sflag [#allocation7], 1
    %24 = vsyncpa %s23, 0
    loop: start=0, step=1, limit=8
    $region2: #{tpu_custom_call.1} parent=1 // loop_pre_header
      _
    $region3: #{tpu_custom_call.1} parent=1 // loop_header
      %s26 = sphi 0, %s30
      %p27 = scmp.ge.s32.totalorder %s26, 8
      %s33 = sphi 0, %s52
      %s34 = sphi 0, %s48
      %s35 = sphi 0, %s44
      %s36 = sphi 0, %s33
      %s37 = sphi 0, %s34
      %s38 = sphi 0, %s35
      %s39 = sphi 0, %s36
      %s40 = sphi 0, %s37
      %s41 = sphi 0, %s38
      %s59 = sphi 0, %s61
      %s62 = sphi 0, %s59
      %s63 = sphi 0, %s62
      %s79 = sphi 0, %s63
      %s89 = sphi 0, %s91
      %s92 = sphi 0, %s89
      %s93 = sphi 0, %s92
      %s109 = sphi 0, %s93
      %s115 = sphi 0, %s117
      %s118 = sphi 0, %s115
      %s119 = sphi 0, %s118
      %s135 = sphi 0, %s119
      %s145 = sphi 0, %s147
      %s148 = sphi 0, %s145
      %s149 = sphi 0, %s148
      %s165 = sphi 0, %s149
    $region4: #{tpu_custom_call.1} parent=1 // loop_header_branch
      %29 = sbr.rel (%p27) target = $region8
    $region5: #{tpu_custom_call.1} parent=1 // loop_body
      %s31 = ssub.s32 %s26, 1
      %s32 = ssub.s32 %s26, 2
      %s42 = sadd.s32 1, %s35
      %p43 = scmp.ge.s32.totalorder %s42, 3
      %s44 = scalar_select %p43, 0, %s42
      %s45 = sadd.s32 1, %s34
      %s46 = scalar_select %p43, %s45, %s34
      %p47 = scmp.ge.s32.totalorder %s46, 2
      %s48 = scalar_select %p47, 0, %s46
      %s49 = sadd.s32 1, %s33
      %s50 = scalar_select %p47, %s49, %s33
      %p51 = scmp.ge.s32.totalorder %s50, 1
      %s52 = scalar_select %p51, 0, %s50
      %s53 = ssub.s32 %s34, %s48
      %s54 = ssub.s32 %s35, %s44
      %s55 = sor.u32 %s53, %s54
      %s56 = ssub.s32 %s33, %s52
      %s57 = sor.u32 %s55, %s56
      %p58 = scmp.eq.s32.totalorder %s57, 0
      %s60 = sadd.s32 %s59, 1
      %s61 = scalar_select %p58, %s59, %s60
      %p64 = pneg %p58
      %p65 = scmp.eq.s32.totalorder %s26, 5
      %p66 = por %p64, %p65
      %p67 = scmp.ne.s32.totalorder %s59, %s62
      %p68 = scmp.eq.s32.totalorder %s26, 0
      %p69 = por %p67, %p68
      %p70 = scmp.ne.s32.totalorder %s59, %s62
      %p71 = scmp.eq.s32.totalorder %s31, 5
      %p72 = por %p70, %p71
      %p73 = scmp.ne.s32.totalorder %s62, %s63
      %p74 = scmp.eq.s32.totalorder %s31, 0
      %p75 = por %p73, %p74
      %p76 = scmp.ne.s32.totalorder %s62, %s63
      %p77 = scmp.eq.s32.totalorder %s32, 5
      %p78 = por %p76, %p77
      %p80 = scmp.ne.s32.totalorder %s63, %s79
      %p81 = scmp.eq.s32.totalorder %s32, 0
      %p82 = por %p80, %p81
      %s83 = ssub.s32 %s34, %s48
      %s84 = ssub.s32 %s35, %s44
      %s85 = sor.u32 %s83, %s84
      %s86 = ssub.s32 %s33, %s52
      %s87 = sor.u32 %s85, %s86
      %p88 = scmp.eq.s32.totalorder %s87, 0
      %s90 = sadd.s32 %s89, 1
      %s91 = scalar_select %p88, %s89, %s90
      %p94 = pneg %p88
      %p95 = scmp.eq.s32.totalorder %s26, 5
      %p96 = por %p94, %p95
      %p97 = scmp.ne.s32.totalorder %s89, %s92
      %p98 = scmp.eq.s32.totalorder %s26, 0
      %p99 = por %p97, %p98
      %p100 = scmp.ne.s32.totalorder %s89, %s92
      %p101 = scmp.eq.s32.totalorder %s31, 5
      %p102 = por %p100, %p101
      %p103 = scmp.ne.s32.totalorder %s92, %s93
      %p104 = scmp.eq.s32.totalorder %s31, 0
      %p105 = por %p103, %p104
      %p106 = scmp.ne.s32.totalorder %s92, %s93
      %p107 = scmp.eq.s32.totalorder %s32, 5
      %p108 = por %p106, %p107
      %p110 = scmp.ne.s32.totalorder %s93, %s109
      %p111 = scmp.eq.s32.totalorder %s32, 0
      %p112 = por %p110, %p111
      %s113 = ssub.s32 %s33, %s52
      %p114 = scmp.eq.s32.totalorder %s113, 0
      %s116 = sadd.s32 %s115, 1
      %s117 = scalar_select %p114, %s115, %s116
      %p120 = pneg %p114
      %p121 = scmp.eq.s32.totalorder %s26, 5
      %p122 = por %p120, %p121
      %p123 = scmp.ne.s32.totalorder %s115, %s118
      %p124 = scmp.eq.s32.totalorder %s26, 0
      %p125 = por %p123, %p124
      %p126 = scmp.ne.s32.totalorder %s115, %s118
      %p127 = scmp.eq.s32.totalorder %s31, 5
      %p128 = por %p126, %p127
      %p129 = scmp.ne.s32.totalorder %s118, %s119
      %p130 = scmp.eq.s32.totalorder %s31, 0
      %p131 = por %p129, %p130
      %p132 = scmp.ne.s32.totalorder %s118, %s119
      %p133 = scmp.eq.s32.totalorder %s32, 5
      %p134 = por %p132, %p133
      %p136 = scmp.ne.s32.totalorder %s119, %s135
      %p137 = scmp.eq.s32.totalorder %s32, 0
      %p138 = por %p136, %p137
      %s139 = ssub.s32 %s33, %s52
      %s140 = ssub.s32 %s34, %s48
      %s141 = sor.u32 %s139, %s140
      %s142 = ssub.s32 %s35, %s44
      %s143 = sor.u32 %s141, %s142
      %p144 = scmp.eq.s32.totalorder %s143, 0
      %s146 = sadd.s32 %s145, 1
      %s147 = scalar_select %p144, %s145, %s146
      %p150 = pneg %p144
      %p151 = scmp.eq.s32.totalorder %s26, 5
      %p152 = por %p150, %p151
      %p153 = scmp.ne.s32.totalorder %s145, %s148
      %p154 = scmp.eq.s32.totalorder %s26, 0
      %p155 = por %p153, %p154
      %p156 = scmp.ne.s32.totalorder %s145, %s148
      %p157 = scmp.eq.s32.totalorder %s31, 5
      %p158 = por %p156, %p157
      %p159 = scmp.ne.s32.totalorder %s148, %s149
      %p160 = scmp.eq.s32.totalorder %s31, 0
      %p161 = por %p159, %p160
      %p162 = scmp.ne.s32.totalorder %s148, %s149
      %p163 = scmp.eq.s32.totalorder %s32, 5
      %p164 = por %p162, %p163
      %p166 = scmp.ne.s32.totalorder %s149, %s165
      %p167 = scmp.eq.s32.totalorder %s32, 0
      %p168 = por %p166, %p167
      %p169 = scmp.le.s32.totalorder 1, %s26
      %p170 = scmp.lt.s32.totalorder %s26, 7
      %p171 = pnand %p169, %p170
      %p172 = pneg %p171
      // Predicated region
      $region9: #{tpu_custom_call.1} parent=5 // pred_check
        _
      $region10: #{tpu_custom_call.1} parent=5 // pred_check_branch
        %174 = sbr.rel (%p171) target = $region12
      $region11: #{tpu_custom_call.1} parent=5 // pred_region
        %s175 = ssub.s32 %s26, 1
        // Predicated region
        $region13: #{tpu_custom_call.1} parent=11 // pred_check
          %p176 = pneg %p131
        $region14: #{tpu_custom_call.1} parent=11 // pred_check_branch
          %178 = sbr.rel (%p176) target = $region16
        $region15: #{tpu_custom_call.1} parent=11 // pred_region
          %p179 = scmp.lt.s32.totalorder %s36, 0
          %s180 = scalar_select %p179, %s36, 0
          %s181 = smul.addr %s180, 2
          %s182 = scalar_lea.vmem %s4, %s181
        $region16: #{tpu_custom_call.1} parent=11 // pred_fallthru
          _
      $region12: #{tpu_custom_call.1} parent=5 // pred_fallthru
        _
      %p183 = scmp.lt.s32.totalorder %s26, 6
      // Predicated region
      $region17: #{tpu_custom_call.1} parent=5 // pred_check
        %p184 = pneg %p183
      $region18: #{tpu_custom_call.1} parent=5 // pred_check_branch
        %186 = sbr.rel (%p184) target = $region20
      $region19: #{tpu_custom_call.1} parent=5 // pred_region
        // Predicated region
        $region21: #{tpu_custom_call.1} parent=19 // pred_check
          %p187 = pneg %p69
        $region22: #{tpu_custom_call.1} parent=19 // pred_check_branch
          %189 = sbr.rel (%p187) target = $region24
        $region23: #{tpu_custom_call.1} parent=19 // pred_region
          %s190 = sand.u32 %s59, 1
          %s191 = scalar_lea.sflag [#allocation6], %s190
          %s192 = sand.u32 %s59, 1
          %s193 = smul.addr %s192, 16
          %s194 = scalar_lea.vmem [#allocation5], %s193
          %s196 = ssub.s32 256, 256
          %197 = vsyncadd %s191, %s196
          %s198 = smul.addr %s35, 8
          %s199 = sadd.s32 %s33, %s198
          %s200 = smul.addr %s34, 24
          %s201 = sadd.s32 %s199, %s200
          %s202 = smul.addr %s201, 32
          %s203 = scalar_lea.hbm %s2, %s202
          %s204 = sshll.u32 %s194, 4
          %s205 = int_to_ptr.vmem [resolvable:$true] %s204
          %210 = dma.hbm_to_vmem [thread:$0]  %s203, 256, %s205, %s191, 32, 32, 2
        $region24: #{tpu_custom_call.1} parent=19 // pred_fallthru
          _
        // Predicated region
        $region25: #{tpu_custom_call.1} parent=19 // pred_check
          %p211 = pneg %p99
        $region26: #{tpu_custom_call.1} parent=19 // pred_check_branch
          %213 = sbr.rel (%p211) target = $region28
        $region27: #{tpu_custom_call.1} parent=19 // pred_region
          %s214 = sand.u32 %s89, 1
          %s215 = scalar_lea.sflag [#allocation9], %s214
          %s216 = sand.u32 %s89, 1
          %s217 = smul.addr %s216, 18
          %s218 = scalar_lea.vmem [#allocation8], %s217
          %s220 = ssub.s32 288, 288
          %221 = vsyncadd %s215, %s220
          %s222 = smul.addr %s35, 9
          %s223 = sadd.s32 %s33, %s222
          %s224 = smul.addr %s34, 27
          %s225 = sadd.s32 %s223, %s224
          %s226 = smul.addr %s225, 32
          %s227 = scalar_lea.hbm %s3, %s226
          %s228 = sshll.u32 %s218, 4
          %s229 = int_to_ptr.vmem [resolvable:$true] %s228
          %234 = dma.hbm_to_vmem [thread:$0]  %s227, 288, %s229, %s215, 32, 32, 2
        $region28: #{tpu_custom_call.1} parent=19 // pred_fallthru
          _
      $region20: #{tpu_custom_call.1} parent=5 // pred_fallthru
        _
      %p235 = scmp.le.s32.totalorder 1, %s26
      %p236 = scmp.lt.s32.totalorder %s26, 7
      %p237 = pnand %p235, %p236
      %p238 = pneg %p237
      // Predicated region
      $region29: #{tpu_custom_call.1} parent=5 // pred_check
        _
      $region30: #{tpu_custom_call.1} parent=5 // pred_check_branch
        %240 = sbr.rel (%p237) target = $region32
      $region31: #{tpu_custom_call.1} parent=5 // pred_region
        %s241 = ssub.s32 %s26, 1
        %s242 = sand.u32 %s62, 1
        %s243 = scalar_lea.sflag [#allocation6], %s242
        %s244 = sand.u32 %s62, 1
        %s245 = smul.addr %s244, 16
        %s246 = scalar_lea.vmem [#allocation5], %s245
        // Predicated region
        $region33: #{tpu_custom_call.1} parent=31 // pred_check
          %p247 = pneg %p75
        $region34: #{tpu_custom_call.1} parent=31 // pred_check_branch
          %249 = sbr.rel (%p247) target = $region36
        $region35: #{tpu_custom_call.1} parent=31 // pred_region
          %250 = dma.done %s243, 256
        $region36: #{tpu_custom_call.1} parent=31 // pred_fallthru
          _
        %s251 = sand.u32 %s92, 1
        %s252 = scalar_lea.sflag [#allocation9], %s251
        %s253 = sand.u32 %s92, 1
        %s254 = smul.addr %s253, 18
        %s255 = scalar_lea.vmem [#allocation8], %s254
        // Predicated region
        $region37: #{tpu_custom_call.1} parent=31 // pred_check
          %p256 = pneg %p105
        $region38: #{tpu_custom_call.1} parent=31 // pred_check_branch
          %258 = sbr.rel (%p256) target = $region40
        $region39: #{tpu_custom_call.1} parent=31 // pred_region
          %259 = dma.done %s252, 288
        $region40: #{tpu_custom_call.1} parent=31 // pred_fallthru
          _
        %s260 = sand.u32 %s62, 1
        %s261 = scalar_lea.sflag [#allocation6], %s260
        %s262 = sand.u32 %s62, 1
        %s263 = smul.addr %s262, 16
        %s264 = scalar_lea.vmem [#allocation5], %s263
        %p265 = pneg %p75
        %p266 = pneg %p72
        %s267 = sand.u32 %s92, 1
        %s268 = scalar_lea.sflag [#allocation9], %s267
        %s269 = sand.u32 %s92, 1
        %s270 = smul.addr %s269, 18
        %s271 = scalar_lea.vmem [#allocation8], %s270
        %p272 = pneg %p105
        %p273 = pneg %p102
        %p274 = scmp.lt.s32.totalorder %s36, 0
        %s275 = scalar_select %p274, %s36, 0
        %s276 = smul.addr %s275, 2
        %s277 = scalar_lea.vmem %s4, %s276
        %p278 = pneg %p131
        %p279 = pneg %p128
        %p280 = pneg %p161
        %p281 = pneg %p158
        %s282 = sand.u32 %s148, 1
        %s283 = scalar_lea.sflag [#allocation7], %s282
        %s284 = sand.u32 %s148, 1
        %s285 = smul.addr %s284, 8
        %s286 = scalar_lea.vmem [#allocation10], %s285
        %p287 = scmp.lt.s32.totalorder %s36, 0
        %s288 = scalar_select %p287, %s36, 0
        %s289 = smul.addr %s288, 2
        %s290 = scalar_lea.vmem %s4, %s289
        %p291 = scmp.eq.s32.totalorder %s38, 0
        %p292 = scmp.eq.s32.totalorder %s38, 1
        %s293 = scalar_select %p292, 19.5, 46.625
        %s294 = scalar_select %p291, 14.5, %s293
        %s295 = scalar_select %p292, 24.75, 40.75
        %s296 = scalar_select %p291, 11.25, %s295
        %v297 = vld [vmem:[%s246] sm:$0x3]
        %s298 = scalar_lea.vmem %s246, 2 [#allocation5]
        %v299 = vld [vmem:[%s298] sm:$0x3]
        %s300 = scalar_lea.vmem %s246, 4 [#allocation5]
        %v301 = vld [vmem:[%s300] sm:$0x3]
        %s302 = scalar_lea.vmem %s246, 6 [#allocation5]
        %v303 = vld [vmem:[%s302] sm:$0x3]
        %v304 = vmul.f32 %v297, 0.5
        %v305 = vtanh.pop %v304
        %v306 = vmul.f32 %v305, 0.5
        %v307 = vadd.f32 %v306, 0.5
        %v308 = vmul.f32 %v299, 0.5
        %v309 = vtanh.pop %v308
        %v310 = vmul.f32 %v309, 0.5
        %v311 = vadd.f32 %v310, 0.5
        %v312 = vld [vmem:[%s290] sm:$0x3]
        %s313 = scalar_lea.vmem %s290, 2
        %v314 = vld [vmem:[%s313] sm:$0x3]
        %v315 = vmax.f32 %v301, -30.0
        %v316 = vmin.f32 %v315, 30.0
        %v317 = vmul.f32 %v316, 1.442695
        %v318 = vpow.pop %v317
        %v319 = vstv %s294
        %v320 = vmul.f32 %v318, %v319
        %v321 = vmax.f32 %v303, -30.0
        %v322 = vmin.f32 %v321, 30.0
        %v323 = vmul.f32 %v322, 1.442695
        %v324 = vpow.pop %v323
        %v325 = vstv %s296
        %v326 = vmul.f32 %v324, %v325
        %v327 = vadd.f32 %v307, %v312
        %v328 = vadd.f32 %v311, %v314
        %v329 = vmul.f32 %v320, 0.5
        %v330 = vsub.f32 %v327, %v329
        %v331 = vadd.f32 %v327, %v329
        %v332 = vmul.f32 %v326, 0.5
        %v333 = vsub.f32 %v328, %v332
        %v334 = vadd.f32 %v328, %v332
        %v335 = vmul.f32 %v320, %v326
        %v336 = vld [vmem:[%s255] sm:$0x3]
        %s337 = scalar_lea.vmem %s255, 2 [#allocation8]
        %v338 = vld [vmem:[%s337] sm:$0x3]
        %s339 = scalar_lea.vmem %s255, 4 [#allocation8]
        %v340 = vld [vmem:[%s339] sm:$0x3]
        %v341 = vsub.f32 %v307, %v340
        %v342 = vmul.f32 %v341, %v341
        %v343 = vmul.f32 %v342, %v338
        %vm344 = vcmask 1041408
        %v345 = vsel %vm344, %v343, 0.0
        %v346 = vrot.slane %v345, 4
        %v347 = vadd.f32 %v345, %v346
        %v348 = vrot.slane %v347, 2
        %v349 = vadd.f32 %v347, %v348
        %v350 = vrot.slane %v349, 1
        %v351 = vadd.f32 %v349, %v350
        %s352 = scalar_lea.vmem %s255, 6 [#allocation8]
        %v353 = vld [vmem:[%s352] sm:$0x3]
        %v354 = vsub.f32 %v311, %v353
        %v355 = vmul.f32 %v354, %v354
        %v356 = vmul.f32 %v355, %v338
        %v357 = vsel %vm344, %v356, 0.0
        %v358 = vrot.slane %v357, 4
        %v359 = vadd.f32 %v357, %v358
        %v360 = vrot.slane %v359, 2
        %v361 = vadd.f32 %v359, %v360
        %v362 = vrot.slane %v361, 1
        %v363 = vadd.f32 %v361, %v362
        %s364 = scalar_lea.vmem %s255, 8 [#allocation8]
        %v365 = vld [vmem:[%s364] sm:$0x3]
        %v366 = vsub.f32 %v301, %v365
        %v367 = vmul.f32 %v366, %v366
        %v368 = vmul.f32 %v338, 0.5
        %v369 = vmul.f32 %v367, %v368
        %v370 = vsel %vm344, %v369, 0.0
        %v371 = vrot.slane %v370, 4
        %v372 = vadd.f32 %v370, %v371
        %v373 = vrot.slane %v372, 2
        %v374 = vadd.f32 %v372, %v373
        %v375 = vrot.slane %v374, 1
        %v376 = vadd.f32 %v374, %v375
        %s377 = scalar_lea.vmem %s255, 10 [#allocation8]
        %v378 = vld [vmem:[%s377] sm:$0x3]
        %v379 = vsub.f32 %v303, %v378
        %v380 = vmul.f32 %v379, %v379
        %v381 = vmul.f32 %v380, %v368
        %v382 = vsel %vm344, %v381, 0.0
        %v383 = vrot.slane %v382, 4
        %v384 = vadd.f32 %v382, %v383
        %v385 = vrot.slane %v384, 2
        %v386 = vadd.f32 %v384, %v385
        %v387 = vrot.slane %v386, 1
        %v388 = vadd.f32 %v386, %v387
        %s389 = sld [smem:[#allocation3 + %s37]]
        // While loop
        $region41: #{tpu_custom_call.1} parent=31 // loop_pre_header
          _
        $region42: #{tpu_custom_call.1} parent=31 // loop_header
          %s391 = sphi 0, %s393
          %p392 = scmp.ge.s32.totalorder %s391, %s389
          %v396 = vphi 0.0, %v460
        $region43: #{tpu_custom_call.1} parent=31 // loop_header_branch
          %395 = sbr.rel (%p392) target = $region47
        $region44: #{tpu_custom_call.1} parent=31 // loop_body
          %s397 = smul.u32 %s391, 8
          %s398 = sshra.s32 %s397, 7
          %s399 = sand.u32 %s397, 127
          %s400 = sadd.s32 %s398, %s37
          %s401 = smul.u32 %s400, 128
          %s402 = sshra.s32 %s397, 7
          %s403 = sand.u32 %s397, 127
          %s404 = sadd.s32 %s401, %s403
          %s405 = sld [smem:[#allocation4 + %s404]]
          %s406 = sadd.s32 %s397, 1
          %s407 = sshra.s32 %s406, 7
          %s408 = sand.u32 %s406, 127
          %s409 = sadd.s32 %s407, %s37
          %s410 = smul.u32 %s409, 128
          %s411 = sshra.s32 %s406, 7
          %s412 = sand.u32 %s406, 127
          %s413 = sadd.s32 %s410, %s412
          %s414 = sld [smem:[#allocation4 + %s413]]
          %s415 = sadd.s32 %s397, 2
          %s416 = sshra.s32 %s415, 7
          %s417 = sand.u32 %s415, 127
          %s418 = sadd.s32 %s416, %s37
          %s419 = smul.u32 %s418, 128
          %s420 = sshra.s32 %s415, 7
          %s421 = sand.u32 %s415, 127
          %s422 = sadd.s32 %s419, %s421
          %s423 = sld [smem:[#allocation4 + %s422]]
          %s424 = sadd.s32 %s397, 3
          %s425 = sshra.s32 %s424, 7
          %s426 = sand.u32 %s424, 127
          %s427 = sadd.s32 %s425, %s37
          %s428 = smul.u32 %s427, 128
          %s429 = sshra.s32 %s424, 7
          %s430 = sand.u32 %s424, 127
          %s431 = sadd.s32 %s428, %s430
          %s432 = sld [smem:[#allocation4 + %s431]]
          %s433 = sadd.s32 %s397, 4
          %s434 = sshra.s32 %s433, 7
          %s435 = sand.u32 %s433, 127
          %s436 = sadd.s32 %s434, %s37
          %s437 = smul.u32 %s436, 128
          %s438 = sshra.s32 %s433, 7
          %s439 = sand.u32 %s433, 127
          %s440 = sadd.s32 %s437, %s439
          %s441 = sld [smem:[#allocation4 + %s440]]
          %v442 = vstv %s414
          %v443 = vmin.f32 %v331, %v442
          %v444 = vstv %s405
          %v445 = vmax.f32 %v330, %v444
          %v446 = vsub.f32 %v443, %v445
          %v447 = vmax.f32 %v446, 0.0
          %v448 = vstv %s432
          %v449 = vmin.f32 %v334, %v448
          %v450 = vstv %s423
          %v451 = vmax.f32 %v333, %v450
          %v452 = vsub.f32 %v449, %v451
          %v453 = vmax.f32 %v452, 0.0
          %v454 = vmul.f32 %v447, %v453
          %v455 = vstv %s441
          %v456 = vadd.f32 %v455, %v335
          %v457 = vsub.f32 %v456, %v454
          %v458 = vrcp.pop %v457
          %v459 = vmul.f32 %v454, %v458
          %v460 = vmax.f32 %v396, %v459
        $region45: #{tpu_custom_call.1} parent=31 // loop_footer
          %s393 = sadd.s32 %s391, 1
        $region46: #{tpu_custom_call.1} parent=31 // loop_footer_branch
          %390 = sbr.rel target = $region42
        $region47: #{tpu_custom_call.1} parent=31 // loop_exit
          _
        %vm461 = vcmp.gt.f32.partialorder %v396, 0.5
        %v462 = vsub.f32 1.0, %v336
        %v463 = vsel %vm461, 0.0, %v462
        %s464 = scalar_lea.vmem %s246, 8 [#allocation5]
        %v465 = vld [vmem:[%s464] sm:$0x3]
        %v466 = vmax.f32 %v465, -16.118095
        %v467 = vmin.f32 %v466, 16.118095
        %v468 = vmax.f32 %v467, 0.0
        %v469 = vmul.f32 %v336, %v467
        %v470 = vsub.f32 %v468, %v469
        %v471 = vand.u32 2147483647, %v467
        %v472 = vsub.f32 0.0, %v471
        %v473 = vmul.f32 %v472, 1.442695
        %v474 = vpow.pop %v473
        %v475 = vadd.f32 %v474, 1.0
        %v476 = vlog2.pop %v475
        %v477 = vmul.f32 %v476, 0.6931472
        %v478 = vadd.f32 %v470, %v477
        %v479 = vadd.f32 %v336, %v463
        %v480 = vmul.f32 %v478, %v479
        %v481 = vsel %vm344, %v480, 0.0
        %v482 = vrot.slane %v481, 4
        %v483 = vadd.f32 %v481, %v482
        %v484 = vrot.slane %v483, 2
        %v485 = vadd.f32 %v483, %v484
        %v486 = vrot.slane %v485, 1
        %v487 = vadd.f32 %v485, %v486
        %s488 = scalar_lea.vmem %s246, 10 [#allocation5]
        %v489 = vld [vmem:[%s488] sm:$0x3]
        %s490 = scalar_lea.vmem %s255, 12 [#allocation8]
        %v491 = vld [vmem:[%s490] sm:$0x3]
        %v492 = vsub.f32 %v489, %v491
        %v493 = vmul.f32 %v492, %v492
        %v494 = vmul.f32 %v493, %v336
        %v495 = vsel %vm344, %v494, 0.0
        %v496 = vrot.slane %v495, 4
        %v497 = vadd.f32 %v495, %v496
        %v498 = vrot.slane %v497, 2
        %v499 = vadd.f32 %v497, %v498
        %v500 = vrot.slane %v499, 1
        %v501 = vadd.f32 %v499, %v500
        %s502 = scalar_lea.vmem %s246, 12 [#allocation5]
        %v503 = vld [vmem:[%s502] sm:$0x3]
        %s504 = scalar_lea.vmem %s255, 14 [#allocation8]
        %v505 = vld [vmem:[%s504] sm:$0x3]
        %v506 = vsub.f32 %v503, %v505
        %v507 = vmul.f32 %v506, %v506
        %v508 = vmul.f32 %v507, %v336
        %v509 = vsel %vm344, %v508, 0.0
        %v510 = vrot.slane %v509, 4
        %v511 = vadd.f32 %v509, %v510
        %v512 = vrot.slane %v511, 2
        %v513 = vadd.f32 %v511, %v512
        %v514 = vrot.slane %v513, 1
        %v515 = vadd.f32 %v513, %v514
        %s516 = scalar_lea.vmem %s246, 14 [#allocation5]
        %v517 = vld [vmem:[%s516] sm:$0x3]
        %s518 = scalar_lea.vmem %s255, 16 [#allocation8]
        %v519 = vld [vmem:[%s518] sm:$0x3]
        %v520 = vsub.f32 %v517, %v519
        %v521 = vmul.f32 %v520, %v520
        %v522 = vmul.f32 %v521, %v336
        %v523 = vsel %vm344, %v522, 0.0
        %v524 = vrot.slane %v523, 4
        %v525 = vadd.f32 %v523, %v524
        %v526 = vrot.slane %v525, 2
        %v527 = vadd.f32 %v525, %v526
        %v528 = vrot.slane %v527, 1
        %v529 = vadd.f32 %v527, %v528
        %530 = vst [vmem:[%s286] sm:$0x1] %v351
        %531 = vst [vmem:[%s286 + $0x1] sm:$0x1] %v363
        %532 = vst [vmem:[%s286 + $0x2] sm:$0x1] %v376
        %533 = vst [vmem:[%s286 + $0x3] sm:$0x1] %v388
        %534 = vst [vmem:[%s286 + $0x4] sm:$0x1] %v487
        %535 = vst [vmem:[%s286 + $0x5] sm:$0x1] %v501
        %536 = vst [vmem:[%s286 + $0x6] sm:$0x1] %v515
        %537 = vst [vmem:[%s286 + $0x7] sm:$0x1] %v529
        %s538 = sand.u32 %s148, 1
        %s539 = scalar_lea.sflag [#allocation7], %s538
        %s540 = sand.u32 %s148, 1
        %s541 = smul.addr %s540, 8
        %s542 = scalar_lea.vmem [#allocation10], %s541
        // Predicated region
        $region48: #{tpu_custom_call.1} parent=31 // pred_check
          %p543 = pneg %p158
        $region49: #{tpu_custom_call.1} parent=31 // pred_check_branch
          %545 = sbr.rel (%p543) target = $region51
        $region50: #{tpu_custom_call.1} parent=31 // pred_region
          %s547 = ssub.s32 128, 128
          %548 = vsyncadd %s539, %s547
          %s549 = smul.addr %s37, 3
          %s550 = sadd.s32 %s38, %s549
          %s551 = smul.addr %s36, 6
          %s552 = sadd.s32 %s550, %s551
          %s553 = smul.addr %s552, 128
          %s554 = scalar_lea.hbm %s5, %s553
          %s556 = sshll.u32 %s542, 4
          %s557 = int_to_ptr.vmem [resolvable:$true] %s556
          %559 = dma.vmem_to_hbm [thread:$0]  %s557, 128, %s554, %s539
        $region51: #{tpu_custom_call.1} parent=31 // pred_fallthru
          _
      $region32: #{tpu_custom_call.1} parent=5 // pred_fallthru
        _
      %p560 = scmp.le.s32.totalorder 2, %s26
      // Predicated region
      $region52: #{tpu_custom_call.1} parent=5 // pred_check
        %p561 = pneg %p560
      $region53: #{tpu_custom_call.1} parent=5 // pred_check_branch
        %563 = sbr.rel (%p561) target = $region55
      $region54: #{tpu_custom_call.1} parent=5 // pred_region
        %s564 = ssub.s32 %s26, 2
        // Predicated region
        $region56: #{tpu_custom_call.1} parent=54 // pred_check
          %p565 = pneg %p164
        $region57: #{tpu_custom_call.1} parent=54 // pred_check_branch
          %567 = sbr.rel (%p565) target = $region59
        $region58: #{tpu_custom_call.1} parent=54 // pred_region
          %s568 = sand.u32 %s149, 1
          %s569 = scalar_lea.sflag [#allocation7], %s568
          %s570 = sand.u32 %s149, 1
          %s571 = smul.addr %s570, 8
          %s572 = scalar_lea.vmem [#allocation10], %s571
          %573 = dma.done %s569, 128
        $region59: #{tpu_custom_call.1} parent=54 // pred_fallthru
          _
      $region55: #{tpu_custom_call.1} parent=5 // pred_fallthru
        _
    $region6: #{tpu_custom_call.1} parent=1 // loop_footer
      %s30 = sadd.s32 1, %s26
    $region7: #{tpu_custom_call.1} parent=1 // loop_footer_branch
      %25 = sbr.rel target = $region3
    $region8: #{tpu_custom_call.1} parent=1 // loop_exit
      _
    %574 = vsyncpa [#allocation6], 1
    %s575 = scalar_lea.sflag [#allocation6], 1
    %576 = vsyncpa %s575, 1
    %577 = vsyncpa [#allocation9], 1
    %s578 = scalar_lea.sflag [#allocation9], 1
    %579 = vsyncpa %s578, 1
    %580 = vsyncpa [#allocation7], 1
    %s581 = scalar_lea.sflag [#allocation7], 1
    %582 = vsyncpa %s581, 1

</llo_original>
